<compile_context>
chip_gen: v5e
topology: v5e:2x2
jax: 0.10.0
libtpu: 0.0.40
codegen_flags: <defaults>
</compile_context>

<pallas_src>
import functools

import jax
import jax.numpy as jnp
from jax.experimental import pallas as pl
from jax.experimental.pallas import tpu as pltpu

EPS = 1e-5
LANES = 128
SUBLANES = 8
_HI = jax.lax.Precision.HIGHEST


def _round_up(x, m):
    return (x + m - 1) // m * m


# --------------------------------------------------------------------------------------
# Kernel (feature-major / batch-on-lanes layout)
# --------------------------------------------------------------------------------------
def ffnn_kernel(cat_ref, cont_ref, w1e_ref, w1c_ref, b1_ref,
                w2_ref, b2_ref, wo_ref, bo_ref, out_ref, *, cat_offsets):
    """One batch tile (tb lanes): fused multi-hot embedding + 3 Linear layers.

    All BN layers and embedding tables are pre-folded into the (transposed) weights.
    """
    tb = cat_ref.shape[1]
    v_total = w1e_ref.shape[1]
    op_dtype = w1e_ref.dtype
    # bf16 operands (production default): single-pass MXU with f32 accumulation.
    # f32 operands: exact/HIGHEST path, kept for numerical validation only.
    prec = _HI if op_dtype == jnp.float32 else None

    # Multi-hot row selector for all categorical features at once, feature-major:
    # hit[v, b] = OR_c (v == id[c, b] + offset_c).  Offsets are Python constants, so
    # the ranges are disjoint and the selector feeds the MXU directly.
    # NOTE: ids are assumed in-range; an out-of-range id silently selects a neighbouring
    #       table's rows (PyTorch's nn.Embedding would raise instead).
    ids = cat_ref[...]                                                 # (n_cat, tb) int32
    row_idx = jax.lax.broadcasted_iota(jnp.int32, (v_total, tb), 0)    # sublane iota
    hit = row_idx == (ids[0:1, :] + cat_offsets[0])
    for c in range(1, ids.shape[0]):
        hit = jnp.logical_or(hit, row_idx == (ids[c:c + 1, :] + cat_offsets[c]))
    onehot = hit.astype(op_dtype)                                      # (V_total, tb)

    cont = cont_ref[...].astype(op_dtype)                              # (n_cont, tb)

    # Layer 1: W1e^T @ onehot + (BN0-folded) W1c^T @ cont + b1, ReLU.  -> (h1, tb)
    h = jnp.dot(w1e_ref[...], onehot, preferred_element_type=jnp.float32, precision=prec)
    h = h + jnp.dot(w1c_ref[...], cont, preferred_element_type=jnp.float32, precision=prec)
    h = jnp.maximum(h + b1_ref[...], 0.0)

    # Layer 2 (BN1 folded into w2/b2), ReLU.  -> (h2, tb)
    h = jnp.dot(w2_ref[...], h.astype(op_dtype),
                preferred_element_type=jnp.float32, precision=prec)
    h = jnp.maximum(h + b2_ref[...], 0.0)

    # Output layer (BN2 folded into wo/bo).  Lane-dense (out_pad, tb) f32 store.
    out_ref[...] = jnp.dot(wo_ref[...], h.astype(op_dtype),
                           preferred_element_type=jnp.float32, precision=prec) + bo_ref[...]


# --------------------------------------------------------------------------------------
# Parameter folding (done once, outside the kernel)
# --------------------------------------------------------------------------------------
def fold_params(params, emb_dims, operand_dtype=jnp.bfloat16):
    """Fold eval-mode BatchNorms + embedding tables into transposed Linear weights.

    Must be re-run (with the same EPS) whenever running stats / weights change.
    """
    w1e, w1c = params["w1e"], params["w1c"]
    h2 = params["w2"].shape[1]
    out_size = params["wo"].shape[1]

    # BN0 (continuous features) -> fold into the continuous half of the first Linear.
    s0 = params["g0"] * jax.lax.rsqrt(params["v0"] + EPS)            # (1, n_cont)
    t0 = params["b0"] - params["m0"] * s0
    w1c_f = w1c * s0.T
    b1_f = params["b1"] + jnp.dot(t0, w1c, precision=_HI)

    # Embedding tables -> fold into the embedding half of the first Linear:
    #   emb_i(idx) @ W1_i  ==  one_hot(idx) @ (T_i @ W1_i)
    p_blocks, offsets, d_off, v_off = [], [], 0, 0
    for tbl, (v, d) in zip(params["emb_tables"], emb_dims):
        p_blocks.append(jnp.dot(tbl, w1e[d_off:d_off + d, :], precision=_HI))
        offsets.append(int(v_off))
        d_off += d
        v_off += v
    p = jnp.concatenate(p_blocks, axis=0)                            # (V_total, h1)

    # BN1 / BN2 are applied after ReLU -> fold forward into the next Linear.
    s1 = params["g1"] * jax.lax.rsqrt(params["v1"] + EPS)
    t1 = params["be1"] - params["m1"] * s1
    w2_f = params["w2"] * s1.T
    b2_f = params["b2"] + jnp.dot(t1, params["w2"], precision=_HI)

    s2 = params["g2"] * jax.lax.rsqrt(params["v2"] + EPS)
    t2 = params["be2"] - params["m2"] * s2
    wo_f = params["wo"] * s2.T
    bo_f = params["bo"] + jnp.dot(t2, params["wo"], precision=_HI)

    # Transpose everything to feature-major; pad the output rows to a sublane multiple
    # (8 rows -> 32 B/row of writeback instead of the previous 128-lane / 512 B/row pad).
    out_pad = _round_up(out_size, SUBLANES)
    wo_t = jnp.zeros((out_pad, h2), jnp.float32).at[:out_size, :].set(wo_f.T)
    bo_t = jnp.zeros((out_pad, 1), jnp.float32).at[:out_size, :].set(bo_f.T)

    return dict(
        w1e_t=p.T.astype(operand_dtype),                 # (h1, V_total)
        w1c_t=w1c_f.T.astype(operand_dtype),             # (h1, n_cont)
        b1_t=b1_f.T.astype(jnp.float32),                 # (h1, 1)
        w2_t=w2_f.T.astype(operand_dtype),               # (h2, h1)
        b2_t=b2_f.T.astype(jnp.float32),                 # (h2, 1)
        wo_t=wo_t.astype(operand_dtype),                 # (out_pad, h2)
        bo_t=bo_t.astype(jnp.float32),                   # (out_pad, 1)
        cat_offsets=tuple(offsets),                      # Python ints, baked into kernel
        out_features=out_size,
    )


# --------------------------------------------------------------------------------------
# Wrapper
# --------------------------------------------------------------------------------------
def ffnn_forward(folded, cont_data, cat_data, *, block_batch=None):
    """Run the fused FFNN kernel over a batch grid (batch mapped to lanes)."""
    B = cont_data.shape[0]

    # TODO(synk): production callers should supply feature-major (n_feat, B) int32/f32
    #             arrays straight from data prep; these transposes are tiny per-call
    #             HBM passes kept here only to preserve the module's (B, n_feat) API.
    cat_t = jnp.asarray(cat_data, jnp.int32).T                       # (n_cat, B)
    cont_t = jnp.asarray(cont_data, jnp.float32).T                   # (n_cont, B)

    n_cat, n_cont = cat_t.shape[0], cont_t.shape[0]
    out_pad = folded["wo_t"].shape[0]

    # Batch tile (lane axis): a multiple of 128 lanes (or the full batch for small B).
    # Default aims for >=2 tiles so v7x's two TensorCores both run, capped at 2048 lanes
    # (double-buffered cat/cont/out tiles stay ~300 KiB -- far under any VMEM limit).
    if block_batch is not None:
        tb = int(block_batch)
        if tb != B and tb % LANES != 0:
            raise ValueError("block_batch must be a multiple of 128 lanes or equal to B")
    elif B < 2 * LANES:
        tb = B                       # single full-width tile; grid=1 is fine for tiny batches
    else:
        tb = max(LANES, min(2048, (pl.cdiv(B, 2) // LANES) * LANES))
    grid = (pl.cdiv(B, tb),)         # ragged last tile handled by Pallas block masking

    weights = (folded["w1e_t"], folded["w1c_t"], folded["b1_t"],
               folded["w2_t"], folded["b2_t"], folded["wo_t"], folded["bo_t"])

    def resident(arr):
        # Full array as one block, constant index_map -> stays VMEM-resident, no re-DMA.
        # TODO(synk): for large V_total*h1 (more than a few MiB) tile the folded table
        #             over an extra "arbitrary" grid axis (or pl.ANY + manual DMA)
        #             instead of keeping it resident.
        nd = arr.ndim
        return pl.BlockSpec(arr.shape, lambda i, _nd=nd: (0,) * _nd)

    kernel = functools.partial(ffnn_kernel, cat_offsets=folded["cat_offsets"])

    out = pl.pallas_call(
        kernel,
        out_shape=jax.ShapeDtypeStruct((out_pad, B), jnp.float32),
        grid=grid,
        in_specs=[pl.BlockSpec((n_cat, tb), lambda i: (0, i)),
                  pl.BlockSpec((n_cont, tb), lambda i: (0, i))]
                 + [resident(w) for w in weights],
        out_specs=pl.BlockSpec((out_pad, tb), lambda i: (0, i)),
        compiler_params=pltpu.CompilerParams(
            dimension_semantics=("parallel",)),   # batch tiles shard across v7x's two TCs
    )(cat_t, cont_t, *weights)

    # (out_pad, B) -> (B, out_size): tiny slice + transpose outside the kernel.
    return out[:folded["out_features"], :].T


# --------------------------------------------------------------------------------------
# Pure-JAX reference (eval-mode module semantics) and init
# --------------------------------------------------------------------------------------
def ffnn_reference(params, cont_data, cat_data):
    emb_outs = [jnp.take(tbl, cat_data[:, i], axis=0)
                for i, tbl in enumerate(params["emb_tables"])]
    x = jnp.concatenate(emb_outs, axis=1).astype(jnp.float32)
    cont_n = ((cont_data - params["m0"]) * jax.lax.rsqrt(params["v0"] + EPS)
              * params["g0"] + params["b0"])
    x = jnp.concatenate([x, cont_n], axis=1)
    w1 = jnp.concatenate([params["w1e"], params["w1c"]], axis=0)
    h = jnp.maximum(jnp.dot(x, w1, precision=_HI) + params["b1"], 0.0)
    h = (h - params["m1"]) * jax.lax.rsqrt(params["v1"] + EPS) * params["g1"] + params["be1"]
    h = jnp.maximum(jnp.dot(h, params["w2"], precision=_HI) + params["b2"], 0.0)
    h = (h - params["m2"]) * jax.lax.rsqrt(params["v2"] + EPS) * params["g2"] + params["be2"]
    return jnp.dot(h, params["wo"], precision=_HI) + params["bo"]


def init_params(key, emb_dims, no_of_cont, lin_layer_sizes, output_size):
    """Deterministic init mirroring the module (kaiming Linear weights).  BatchNorm
    params/running-stats get non-trivial values so the BN-folding path is exercised."""
    keys = iter(jax.random.split(key, 64))

    def kaiming(k, fan_in, fan_out):
        return jax.random.normal(k, (fan_in, fan_out), jnp.float32) * (2.0 / fan_in) ** 0.5

    def bias(k, fan_in, fan_out):
        bound = 1.0 / (fan_in ** 0.5)
        return jax.random.uniform(k, (1, fan_out), jnp.float32, -bound, bound)

    def bn(n):
        return dict(
            g=jax.random.uniform(next(keys), (1, n), jnp.float32, 0.5, 1.5),
            b=jax.random.normal(next(keys), (1, n), jnp.float32) * 0.1,
            m=jax.random.normal(next(keys), (1, n), jnp.float32) * 0.5,
            v=jax.random.uniform(next(keys), (1, n), jnp.float32, 0.5, 1.5),
        )

    emb_tables = [jax.random.normal(next(keys), (v, d), jnp.float32) for v, d in emb_dims]
    no_of_embs = sum(d for _, d in emb_dims)
    h1, h2 = lin_layer_sizes
    w1 = kaiming(next(keys), no_of_embs + no_of_cont, h1)
    bn0, bn1, bn2 = bn(no_of_cont), bn(h1), bn(h2)
    return dict(
        emb_tables=emb_tables,
        g0=bn0["g"], b0=bn0["b"], m0=bn0["m"], v0=bn0["v"],
        w1e=w1[:no_of_embs, :], w1c=w1[no_of_embs:, :],
        b1=bias(next(keys), no_of_embs + no_of_cont, h1),
        g1=bn1["g"], be1=bn1["b"], m1=bn1["m"], v1=bn1["v"],
        w2=kaiming(next(keys), h1, h2), b2=bias(next(keys), h1, h2),
        g2=bn2["g"], be2=bn2["b"], m2=bn2["m"], v2=bn2["v"],
        wo=kaiming(next(keys), h2, output_size), bo=bias(next(keys), h2, output_size),
    )


def _make_data(key, B, emb_dims, no_of_cont):
    k_cont, *k_cats = jax.random.split(key, 1 + len(emb_dims))
    cont_data = jax.random.normal(k_cont, (B, no_of_cont), jnp.float32)
    cat_data = jnp.stack(
        [jax.random.randint(k, (B,), 0, v, jnp.int32)
         for k, (v, _) in zip(k_cats, emb_dims)], axis=1)
    return cont_data, cat_data


if __name__ == "__main__":
    # Config consistent with the module: 5 categorical features,
    # emb_dims = [(vocab, min(50, (vocab+1)//2))], 4 continuous features.
    emb_dims = [(10, 5), (6, 3), (4, 2), (8, 4), (20, 10)]   # no_of_embs = 24, V_total = 48
    no_of_cont = 4
    lin_layer_sizes = [32, 16]
    output_size = 1

    key = jax.random.PRNGKey(0)
    k_params, k_data1, k_data2 = jax.random.split(key, 3)
    params = init_params(k_params, emb_dims, no_of_cont, lin_layer_sizes, output_size)

    # --- Validation path: small odd batch, f32 operands + HIGHEST precision ------------
    B1 = 30                                                  # non-multiple of 8: single tile
    cont1, cat1 = _make_data(k_data1, B1, emb_dims, no_of_cont)
    ref1 = ffnn_reference(params, cont1, cat1)
    folded_f32 = fold_params(params, emb_dims, operand_dtype=jnp.float32)
    out1 = jax.block_until_ready(ffnn_forward(folded_f32, cont1, cat1))
    assert out1.shape == (B1, output_size)
    assert jnp.allclose(out1, ref1, atol=1e-4, rtol=1e-4), "f32 Pallas output mismatch"

    # --- Production path: bf16 operands, multi-tile batch grid (2 x 128-lane tiles) ----
    B2 = 256
    cont2, cat2 = _make_data(k_data2, B2, emb_dims, no_of_cont)
    ref2 = ffnn_reference(params, cont2, cat2)
    folded_bf16 = fold_params(params, emb_dims, operand_dtype=jnp.bfloat16)
    out2 = jax.block_until_ready(ffnn_forward(folded_bf16, cont2, cat2))
    assert out2.shape == (B2, output_size)
    assert jnp.allclose(out2, ref2, atol=5e-2, rtol=5e-2), "bf16 Pallas output mismatch"

    print("KERNEL_OK")
</pallas_src>

<mosaic_0001>
module attributes {stable_mosaic.version = 11 : i64} {
  func.func @ffnn_kernel(%arg0: i32, %arg1: memref<5x30xi32, #tpu.memory_space<vmem>>, %arg2: memref<4x30xf32, #tpu.memory_space<vmem>>, %arg3: memref<32x48xf32, #tpu.memory_space<vmem>>, %arg4: memref<32x4xf32, #tpu.memory_space<vmem>>, %arg5: memref<32x1xf32, #tpu.memory_space<vmem>>, %arg6: memref<16x32xf32, #tpu.memory_space<vmem>>, %arg7: memref<16x1xf32, #tpu.memory_space<vmem>>, %arg8: memref<8x16xf32, #tpu.memory_space<vmem>>, %arg9: memref<8x1xf32, #tpu.memory_space<vmem>>, %arg10: memref<8x30xf32, #tpu.memory_space<vmem>>) attributes {dimension_semantics = [#tpu.dimension_semantics<parallel>], iteration_bounds = array<i64: 1>, scalar_prefetch = 0 : i64, scratch_operands = 0 : i64, tpu.core_type = #tpu.core_type<tc>, window_params = [{transform_indices = @transform_0, window_bounds = array<i64: 5, 30>}, {transform_indices = @transform_1, window_bounds = array<i64: 4, 30>}, {pipeline_mode = #tpu.pipeline_mode<synchronous>, transform_indices = @transform_2, window_bounds = array<i64: 32, 48>}, {pipeline_mode = #tpu.pipeline_mode<synchronous>, transform_indices = @transform_3, window_bounds = array<i64: 32, 4>}, {pipeline_mode = #tpu.pipeline_mode<synchronous>, transform_indices = @transform_4, window_bounds = array<i64: 32, 1>}, {pipeline_mode = #tpu.pipeline_mode<synchronous>, transform_indices = @transform_5, window_bounds = array<i64: 16, 32>}, {pipeline_mode = #tpu.pipeline_mode<synchronous>, transform_indices = @transform_6, window_bounds = array<i64: 16, 1>}, {pipeline_mode = #tpu.pipeline_mode<synchronous>, transform_indices = @transform_7, window_bounds = array<i64: 8, 16>}, {pipeline_mode = #tpu.pipeline_mode<synchronous>, transform_indices = @transform_8, window_bounds = array<i64: 8, 1>}, {transform_indices = @transform_9, window_bounds = array<i64: 8, 30>}]} {
    %c0 = arith.constant 0 : index
    %c0_0 = arith.constant 0 : index
    %0 = vector.load %arg1[%c0, %c0_0] : memref<5x30xi32, #tpu.memory_space<vmem>>, vector<5x30xi32>
    %1 = tpu.iota {dimensions = array<i32: 0>} : vector<48x30xi32>
    %2 = vector.extract_strided_slice %0 {offsets = [0, 0], sizes = [1, 30], strides = [1, 1]} : vector<5x30xi32> to vector<1x30xi32>
    %c0_i32 = arith.constant 0 : i32
    %3 = vector.broadcast %c0_i32 : i32 to vector<1x30xi32>
    %4 = arith.addi %2, %3 : vector<1x30xi32>
    %5 = vector.broadcast %4 : vector<1x30xi32> to vector<48x30xi32>
    %6 = arith.cmpi eq, %1, %5 : vector<48x30xi32>
    %7 = vector.extract_strided_slice %0 {offsets = [1, 0], sizes = [1, 30], strides = [1, 1]} : vector<5x30xi32> to vector<1x30xi32>
    %c10_i32 = arith.constant 10 : i32
    %8 = vector.broadcast %c10_i32 : i32 to vector<1x30xi32>
    %9 = arith.addi %7, %8 : vector<1x30xi32>
    %10 = vector.broadcast %9 : vector<1x30xi32> to vector<48x30xi32>
    %11 = arith.cmpi eq, %1, %10 : vector<48x30xi32>
    %12 = arith.ori %6, %11 : vector<48x30xi1>
    %13 = vector.extract_strided_slice %0 {offsets = [2, 0], sizes = [1, 30], strides = [1, 1]} : vector<5x30xi32> to vector<1x30xi32>
    %c16_i32 = arith.constant 16 : i32
    %14 = vector.broadcast %c16_i32 : i32 to vector<1x30xi32>
    %15 = arith.addi %13, %14 : vector<1x30xi32>
    %16 = vector.broadcast %15 : vector<1x30xi32> to vector<48x30xi32>
    %17 = arith.cmpi eq, %1, %16 : vector<48x30xi32>
    %18 = arith.ori %12, %17 : vector<48x30xi1>
    %19 = vector.extract_strided_slice %0 {offsets = [3, 0], sizes = [1, 30], strides = [1, 1]} : vector<5x30xi32> to vector<1x30xi32>
    %c20_i32 = arith.constant 20 : i32
    %20 = vector.broadcast %c20_i32 : i32 to vector<1x30xi32>
    %21 = arith.addi %19, %20 : vector<1x30xi32>
    %22 = vector.broadcast %21 : vector<1x30xi32> to vector<48x30xi32>
    %23 = arith.cmpi eq, %1, %22 : vector<48x30xi32>
    %24 = arith.ori %18, %23 : vector<48x30xi1>
    %25 = vector.extract_strided_slice %0 {offsets = [4, 0], sizes = [1, 30], strides = [1, 1]} : vector<5x30xi32> to vector<1x30xi32>
    %c28_i32 = arith.constant 28 : i32
    %26 = vector.broadcast %c28_i32 : i32 to vector<1x30xi32>
    %27 = arith.addi %25, %26 : vector<1x30xi32>
    %28 = vector.broadcast %27 : vector<1x30xi32> to vector<48x30xi32>
    %29 = arith.cmpi eq, %1, %28 : vector<48x30xi32>
    %30 = arith.ori %24, %29 : vector<48x30xi1>
    %31 = arith.extui %30 : vector<48x30xi1> to vector<48x30xi32>
    %32 = arith.sitofp %31 : vector<48x30xi32> to vector<48x30xf32>
    %c0_1 = arith.constant 0 : index
    %c0_2 = arith.constant 0 : index
    %33 = vector.load %arg2[%c0_1, %c0_2] : memref<4x30xf32, #tpu.memory_space<vmem>>, vector<4x30xf32>
    %c0_3 = arith.constant 0 : index
    %c0_4 = arith.constant 0 : index
    %34 = vector.load %arg3[%c0_3, %c0_4] : memref<32x48xf32, #tpu.memory_space<vmem>>, vector<32x48xf32>
    %cst = arith.constant dense<0.000000e+00> : vector<32x30xf32>
    %35 = tpu.matmul %34, %32, %cst {dimension_numbers = #tpu.dot_dimension_numbers<[1], [0], [0], [1], [0, 0, 1, 1], [], []>, precision = #tpu.contract_precision<fp32>} : vector<32x48xf32>, vector<48x30xf32>, vector<32x30xf32> -> vector<32x30xf32>
    %c0_5 = arith.constant 0 : index
    %c0_6 = arith.constant 0 : index
    %36 = vector.load %arg4[%c0_5, %c0_6] : memref<32x4xf32, #tpu.memory_space<vmem>>, vector<32x4xf32>
    %cst_7 = arith.constant dense<0.000000e+00> : vector<32x30xf32>
    %37 = tpu.matmul %36, %33, %cst_7 {dimension_numbers = #tpu.dot_dimension_numbers<[1], [0], [0], [1], [0, 0, 1, 1], [], []>, precision = #tpu.contract_precision<fp32>} : vector<32x4xf32>, vector<4x30xf32>, vector<32x30xf32> -> vector<32x30xf32>
    %38 = arith.addf %35, %37 : vector<32x30xf32>
    %c0_8 = arith.constant 0 : index
    %c0_9 = arith.constant 0 : index
    %39 = vector.load %arg5[%c0_8, %c0_9] : memref<32x1xf32, #tpu.memory_space<vmem>>, vector<32x1xf32>
    %40 = vector.broadcast %39 : vector<32x1xf32> to vector<32x30xf32>
    %41 = arith.addf %38, %40 : vector<32x30xf32>
    %cst_10 = arith.constant 0.000000e+00 : f32
    %42 = vector.broadcast %cst_10 : f32 to vector<32x30xf32>
    %43 = arith.maximumf %41, %42 : vector<32x30xf32>
    %c0_11 = arith.constant 0 : index
    %c0_12 = arith.constant 0 : index
    %44 = vector.load %arg6[%c0_11, %c0_12] : memref<16x32xf32, #tpu.memory_space<vmem>>, vector<16x32xf32>
    %cst_13 = arith.constant dense<0.000000e+00> : vector<16x30xf32>
    %45 = tpu.matmul %44, %43, %cst_13 {dimension_numbers = #tpu.dot_dimension_numbers<[1], [0], [0], [1], [0, 0, 1, 1], [], []>, precision = #tpu.contract_precision<fp32>} : vector<16x32xf32>, vector<32x30xf32>, vector<16x30xf32> -> vector<16x30xf32>
    %c0_14 = arith.constant 0 : index
    %c0_15 = arith.constant 0 : index
    %46 = vector.load %arg7[%c0_14, %c0_15] : memref<16x1xf32, #tpu.memory_space<vmem>>, vector<16x1xf32>
    %47 = vector.broadcast %46 : vector<16x1xf32> to vector<16x30xf32>
    %48 = arith.addf %45, %47 : vector<16x30xf32>
    %cst_16 = arith.constant 0.000000e+00 : f32
    %49 = vector.broadcast %cst_16 : f32 to vector<16x30xf32>
    %50 = arith.maximumf %48, %49 : vector<16x30xf32>
    %c0_17 = arith.constant 0 : index
    %c0_18 = arith.constant 0 : index
    %51 = vector.load %arg8[%c0_17, %c0_18] : memref<8x16xf32, #tpu.memory_space<vmem>>, vector<8x16xf32>
    %cst_19 = arith.constant dense<0.000000e+00> : vector<8x30xf32>
    %52 = tpu.matmul %51, %50, %cst_19 {dimension_numbers = #tpu.dot_dimension_numbers<[1], [0], [0], [1], [0, 0, 1, 1], [], []>, precision = #tpu.contract_precision<fp32>} : vector<8x16xf32>, vector<16x30xf32>, vector<8x30xf32> -> vector<8x30xf32>
    %c0_20 = arith.constant 0 : index
    %c0_21 = arith.constant 0 : index
    %53 = vector.load %arg9[%c0_20, %c0_21] : memref<8x1xf32, #tpu.memory_space<vmem>>, vector<8x1xf32>
    %54 = vector.broadcast %53 : vector<8x1xf32> to vector<8x30xf32>
    %55 = arith.addf %52, %54 : vector<8x30xf32>
    %c0_22 = arith.constant 0 : index
    %c0_23 = arith.constant 0 : index
    %56 = vector.load %arg10[%c0_22, %c0_23] : memref<8x30xf32, #tpu.memory_space<vmem>>, vector<8x30xf32>
    tpu.vector_store %arg10[%c0_22, %c0_23], %55 {strides = array<i32>} : memref<8x30xf32, #tpu.memory_space<vmem>>, vector<8x30xf32>,
    return
  }
  func.func @transform_0(%arg0: i32) -> (i32, i32) {
    %c0_i32 = arith.constant 0 : i32
    %c0_i32_0 = arith.constant 0 : i32
    return %c0_i32, %arg0 : i32, i32
  }
  func.func @transform_1(%arg0: i32) -> (i32, i32) {
    %c0_i32 = arith.constant 0 : i32
    %c0_i32_0 = arith.constant 0 : i32
    return %c0_i32, %arg0 : i32, i32
  }
  func.func @transform_2(%arg0: i32) -> (i32, i32) {
    %c0_i32 = arith.constant 0 : i32
    %c0_i32_0 = arith.constant 0 : i32
    %c0_i32_1 = arith.constant 0 : i32
    return %c0_i32, %c0_i32_0 : i32, i32
  }
  func.func @transform_3(%arg0: i32) -> (i32, i32) {
    %c0_i32 = arith.constant 0 : i32
    %c0_i32_0 = arith.constant 0 : i32
    %c0_i32_1 = arith.constant 0 : i32
    return %c0_i32, %c0_i32_0 : i32, i32
  }
  func.func @transform_4(%arg0: i32) -> (i32, i32) {
    %c0_i32 = arith.constant 0 : i32
    %c0_i32_0 = arith.constant 0 : i32
    %c0_i32_1 = arith.constant 0 : i32
    return %c0_i32, %c0_i32_0 : i32, i32
  }
  func.func @transform_5(%arg0: i32) -> (i32, i32) {
    %c0_i32 = arith.constant 0 : i32
    %c0_i32_0 = arith.constant 0 : i32
    %c0_i32_1 = arith.constant 0 : i32
    return %c0_i32, %c0_i32_0 : i32, i32
  }
  func.func @transform_6(%arg0: i32) -> (i32, i32) {
    %c0_i32 = arith.constant 0 : i32
    %c0_i32_0 = arith.constant 0 : i32
    %c0_i32_1 = arith.constant 0 : i32
    return %c0_i32, %c0_i32_0 : i32, i32
  }
  func.func @transform_7(%arg0: i32) -> (i32, i32) {
    %c0_i32 = arith.constant 0 : i32
    %c0_i32_0 = arith.constant 0 : i32
    %c0_i32_1 = arith.constant 0 : i32
    return %c0_i32, %c0_i32_0 : i32, i32
  }
  func.func @transform_8(%arg0: i32) -> (i32, i32) {
    %c0_i32 = arith.constant 0 : i32
    %c0_i32_0 = arith.constant 0 : i32
    %c0_i32_1 = arith.constant 0 : i32
    return %c0_i32, %c0_i32_0 : i32, i32
  }
  func.func @transform_9(%arg0: i32) -> (i32, i32) {
    %c0_i32 = arith.constant 0 : i32
    %c0_i32_0 = arith.constant 0 : i32
    return %c0_i32, %arg0 : i32, i32
  }
}

</mosaic_0001>

<llo_original>
// kernel: tpu_custom_call.1
$region0: #{tpu_custom_call.1}
  #allocation0 [shape = 'u32[]', space=smem, size = 0x4, offset = 0x4, fixed_abs, tag = 'smem constant byte address 0x4 - core index']
  #allocation1 [shape = 'u32[72,128]{1,0:T(1,128)}', space=vmem, size = 0x9000, scoped, tag = 'internal scratch']
  %s0 = inlined_call_operand.vmem [shape: s32[5,30], index: 0, kind: input, shape index: {}]
  %s1 = inlined_call_operand.vmem [shape: f32[4,30], index: 1, kind: input, shape index: {}]
  %s2 = inlined_call_operand.vmem [shape: f32[32,48], index: 2, kind: input, shape index: {}]
  %s3 = inlined_call_operand.vmem [shape: f32[32,4], index: 3, kind: input, shape index: {}]
  %s4 = inlined_call_operand.vmem [shape: f32[32,1], index: 4, kind: input, shape index: {}]
  %s5 = inlined_call_operand.vmem [shape: f32[16,32], index: 5, kind: input, shape index: {}]
  %s6 = inlined_call_operand.vmem [shape: f32[16,1], index: 6, kind: input, shape index: {}]
  %s7 = inlined_call_operand.vmem [shape: f32[8,16], index: 7, kind: input, shape index: {}]
  %s8 = inlined_call_operand.vmem [shape: f32[8,1], index: 8, kind: input, shape index: {}]
  %s9 = inlined_call_operand.hbm [shape: f32[8,30], index: 9, kind: output, shape index: {}]
  %s10 = sld [smem:[#allocation0]]
  $region46: #{tpu_custom_call.1} parent=0
    _
  %s12 = ssub.s32 1, %s10
  %s13 = scalar_select 0, %s12, %s10
  $region1: #{tpu_custom_call.1} parent=0
    #allocation2 [shape = 'u8[4096]{0}', space=vmem, size = 0x1000, scoped, tag = 'output window, operand 0, single buffered']
    #allocation3 [shape = 's32[1]{0}', space=sflag, size = 0x4, scoped, tag = 'scoped memory for tpu_custom_call.1']
    %14 = vsyncpa [#allocation3], 0
    // Predicated region
    $region2: #{tpu_custom_call.1} parent=1 // pred_check
      _
    $region3: #{tpu_custom_call.1} parent=1 // pred_check_branch
      %16 = sbr.rel (0) target = $region5
    $region4: #{tpu_custom_call.1} parent=1 // pred_region
      _
    $region5: #{tpu_custom_call.1} parent=1 // pred_fallthru
      _
    // Predicated region
    $region6: #{tpu_custom_call.1} parent=1 // pred_check
      _
    $region7: #{tpu_custom_call.1} parent=1 // pred_check_branch
      %18 = sbr.rel (0) target = $region9
    $region8: #{tpu_custom_call.1} parent=1 // pred_region
      _
    $region9: #{tpu_custom_call.1} parent=1 // pred_fallthru
      _
    // Predicated region
    $region10: #{tpu_custom_call.1} parent=1 // pred_check
      _
    $region11: #{tpu_custom_call.1} parent=1 // pred_check_branch
      %20 = sbr.rel (0) target = $region13
    $region12: #{tpu_custom_call.1} parent=1 // pred_region
      _
    $region13: #{tpu_custom_call.1} parent=1 // pred_fallthru
      _
    // Predicated region
    $region14: #{tpu_custom_call.1} parent=1 // pred_check
      _
    $region15: #{tpu_custom_call.1} parent=1 // pred_check_branch
      %22 = sbr.rel (0) target = $region17
    $region16: #{tpu_custom_call.1} parent=1 // pred_region
      _
    $region17: #{tpu_custom_call.1} parent=1 // pred_fallthru
      _
    // Predicated region
    $region18: #{tpu_custom_call.1} parent=1 // pred_check
      _
    $region19: #{tpu_custom_call.1} parent=1 // pred_check_branch
      %24 = sbr.rel (0) target = $region21
    $region20: #{tpu_custom_call.1} parent=1 // pred_region
      _
    $region21: #{tpu_custom_call.1} parent=1 // pred_fallthru
      _
    // Predicated region
    $region22: #{tpu_custom_call.1} parent=1 // pred_check
      _
    $region23: #{tpu_custom_call.1} parent=1 // pred_check_branch
      %26 = sbr.rel (0) target = $region25
    $region24: #{tpu_custom_call.1} parent=1 // pred_region
      _
    $region25: #{tpu_custom_call.1} parent=1 // pred_fallthru
      _
    // Predicated region
    $region26: #{tpu_custom_call.1} parent=1 // pred_check
      _
    $region27: #{tpu_custom_call.1} parent=1 // pred_check_branch
      %28 = sbr.rel (0) target = $region29
    $region28: #{tpu_custom_call.1} parent=1 // pred_region
      _
    $region29: #{tpu_custom_call.1} parent=1 // pred_fallthru
      _
    // Predicated region
    $region30: #{tpu_custom_call.1} parent=1 // pred_check
      _
    $region31: #{tpu_custom_call.1} parent=1 // pred_check_branch
      %30 = sbr.rel (0) target = $region33
    $region32: #{tpu_custom_call.1} parent=1 // pred_region
      _
    $region33: #{tpu_custom_call.1} parent=1 // pred_fallthru
      _
    // Predicated region
    $region34: #{tpu_custom_call.1} parent=1 // pred_check
      _
    $region35: #{tpu_custom_call.1} parent=1 // pred_check_branch
      %32 = sbr.rel (0) target = $region37
    $region36: #{tpu_custom_call.1} parent=1 // pred_region
      _
    $region37: #{tpu_custom_call.1} parent=1 // pred_fallthru
      _
    %v33 = vld [vmem:[%s0] sm:$0x1f]
    %v34 = vlaneseq
    %v35 = vshrl.u32 %v34, 7
    %v36 = vadd.s32 %v35, 8
    %v37 = vadd.s32 %v35, 16
    %v38 = vadd.s32 %v35, 24
    %v39 = vadd.s32 %v35, 32
    %v40 = vadd.s32 %v35, 40
    %v41 = vperm.slane %v33, 0
    %vm42 = vcmp.eq.s32.totalorder %v35, %v41
    %vm43 = vcmp.eq.s32.totalorder %v36, %v41
    %vm44 = vcmp.eq.s32.totalorder %v37, %v41
    %vm45 = vcmp.eq.s32.totalorder %v38, %v41
    %vm46 = vcmp.eq.s32.totalorder %v39, %v41
    %vm47 = vcmp.eq.s32.totalorder %v40, %v41
    %v48 = vadd.s32 %v33, 10
    %v49 = vperm.slane %v48, 1
    %vm50 = vcmp.eq.s32.totalorder %v35, %v49
    %vm51 = vcmp.eq.s32.totalorder %v36, %v49
    %vm52 = vcmp.eq.s32.totalorder %v37, %v49
    %vm53 = vcmp.eq.s32.totalorder %v38, %v49
    %vm54 = vcmp.eq.s32.totalorder %v39, %v49
    %vm55 = vcmp.eq.s32.totalorder %v40, %v49
    %vm56 = vmor %vm42, %vm50
    %vm57 = vmor %vm43, %vm51
    %vm58 = vmor %vm44, %vm52
    %vm59 = vmor %vm45, %vm53
    %vm60 = vmor %vm46, %vm54
    %vm61 = vmor %vm47, %vm55
    %v62 = vadd.s32 %v33, 16
    %v63 = vperm.slane %v62, 2
    %vm64 = vcmp.eq.s32.totalorder %v35, %v63
    %vm65 = vcmp.eq.s32.totalorder %v36, %v63
    %vm66 = vcmp.eq.s32.totalorder %v37, %v63
    %vm67 = vcmp.eq.s32.totalorder %v38, %v63
    %vm68 = vcmp.eq.s32.totalorder %v39, %v63
    %vm69 = vcmp.eq.s32.totalorder %v40, %v63
    %vm70 = vmor %vm56, %vm64
    %vm71 = vmor %vm57, %vm65
    %vm72 = vmor %vm58, %vm66
    %vm73 = vmor %vm59, %vm67
    %vm74 = vmor %vm60, %vm68
    %vm75 = vmor %vm61, %vm69
    %v76 = vadd.s32 %v33, 20
    %v77 = vperm.slane %v76, 3
    %vm78 = vcmp.eq.s32.totalorder %v35, %v77
    %vm79 = vcmp.eq.s32.totalorder %v36, %v77
    %vm80 = vcmp.eq.s32.totalorder %v37, %v77
    %vm81 = vcmp.eq.s32.totalorder %v38, %v77
    %vm82 = vcmp.eq.s32.totalorder %v39, %v77
    %vm83 = vcmp.eq.s32.totalorder %v40, %v77
    %vm84 = vmor %vm70, %vm78
    %vm85 = vmor %vm71, %vm79
    %vm86 = vmor %vm72, %vm80
    %vm87 = vmor %vm73, %vm81
    %vm88 = vmor %vm74, %vm82
    %vm89 = vmor %vm75, %vm83
    %v90 = vadd.s32 %v33, 28
    %v91 = vperm.slane %v90, 4
    %vm92 = vcmp.eq.s32.totalorder %v35, %v91
    %vm93 = vcmp.eq.s32.totalorder %v36, %v91
    %vm94 = vcmp.eq.s32.totalorder %v37, %v91
    %vm95 = vcmp.eq.s32.totalorder %v38, %v91
    %vm96 = vcmp.eq.s32.totalorder %v39, %v91
    %vm97 = vcmp.eq.s32.totalorder %v40, %v91
    %vm98 = vmor %vm84, %vm92
    %vm99 = vmor %vm85, %vm93
    %vm100 = vmor %vm86, %vm94
    %vm101 = vmor %vm87, %vm95
    %vm102 = vmor %vm88, %vm96
    %vm103 = vmor %vm89, %vm97
    %v104 = vsel %vm98, 1, 0
    %v105 = vsel %vm99, 1, 0
    %v106 = vsel %vm100, 1, 0
    %v107 = vsel %vm101, 1, 0
    %v108 = vsel %vm102, 1, 0
    %v109 = vsel %vm103, 1, 0
    %v110 = vcvt.s32.f32 %v104
    %v111 = vcvt.s32.f32 %v105
    %v112 = vcvt.s32.f32 %v106
    %v113 = vcvt.s32.f32 %v107
    %v114 = vcvt.s32.f32 %v108
    %v115 = vcvt.s32.f32 %v109
    %v116 = vld [vmem:[%s1] sm:$0xf]
    %v117 = vld [vmem:[%s2] sm:$0xff]
    %v118 = vld [vmem:[%s2 + $0x8] sm:$0xff]
    %v119 = vld [vmem:[%s2 + $0x10] sm:$0xff]
    %v120 = vld [vmem:[%s2 + $0x18] sm:$0xff]
    %v121 = vld [vmem:[%s3] sm:$0xff]
    %v122 = vld [vmem:[%s3 + $0x8] sm:$0xff]
    %v123 = vld [vmem:[%s3 + $0x10] sm:$0xff]
    %v124 = vld [vmem:[%s3 + $0x18] sm:$0xff]
    %vm125 = vcmask 31744
    %v127 = vsel %vm125, %v121, 0
    %v130 = vsel %vm125, %v122, 0
    %v133 = vsel %vm125, %v123, 0
    %v136 = vsel %vm125, %v124, 0
    %vm138 = vcmask 1043456
    %v140 = vsel %vm138, %v116, 0
    %142 = vmatpush.msra.mxu0 0.0
    %143 = vmatpush.msra.mxu0 0.0
    %144 = vmatpush.msra.mxu0 0.0
    %145 = vmatpush.msra.mxu0 0.0
    %146 = vmatpush.msra.mxu0 0.0
    %147 = vmatpush.msra.mxu0 0.0
    %148 = vmatpush.msra.mxu0 0.0
    %149 = vmatpush.msra.mxu0 0.0
    %150 = vmatpush.msra.mxu0 0.0
    %151 = vmatpush.msra.mxu0 0.0
    %152 = vmatpush.msra.mxu0 0.0
    %153 = vmatpush.msra.mxu0 0.0
    %154 = vmatpush.msra.mxu0 0.0
    %155 = vmatpush.msra.mxu0 0.0
    %156 = vmatpush.msra.mxu0 0.0
    %v157 = vand.u32 %v140, 4294901760
    %158 = vmatpush.msra.mxu0 %v157
    %v159 = vand.u32 %v127, 4294901760
    %v160 = vsub.f32 %v127, %v159
    %v161 = vand.u32 %v160, 4294901760
    %v162 = vsub.f32 %v160, %v161
    %v163 = vand.u32 %v162, 4294901760
    %164 = vmatmul.f32.gmra.mxu0 %v163
    %v165 = vpop.f32.mrf.mxu0
    %v166 = vadd.f32 0.0, %v165
    %v167 = vand.u32 %v130, 4294901760
    %v168 = vsub.f32 %v130, %v167
    %v169 = vand.u32 %v168, 4294901760
    %v170 = vsub.f32 %v168, %v169
    %v171 = vand.u32 %v170, 4294901760
    %172 = vmatmul.f32.gmra.mxu0 %v171
    %v173 = vpop.f32.mrf.mxu0
    %v174 = vadd.f32 0.0, %v173
    %v175 = vand.u32 %v133, 4294901760
    %v176 = vsub.f32 %v133, %v175
    %v177 = vand.u32 %v176, 4294901760
    %v178 = vsub.f32 %v176, %v177
    %v179 = vand.u32 %v178, 4294901760
    %180 = vmatmul.f32.gmra.mxu0 %v179
    %v181 = vpop.f32.mrf.mxu0
    %v182 = vadd.f32 0.0, %v181
    %v183 = vand.u32 %v136, 4294901760
    %v184 = vsub.f32 %v136, %v183
    %v185 = vand.u32 %v184, 4294901760
    %v186 = vsub.f32 %v184, %v185
    %v187 = vand.u32 %v186, 4294901760
    %188 = vmatmul.f32.gmra.mxu0 %v187
    %v189 = vpop.f32.mrf.mxu0
    %v190 = vadd.f32 0.0, %v189
    %191 = vdwg.mxu0
    %192 = vmatpush.msra.mxu0 0.0
    %193 = vmatpush.msra.mxu0 0.0
    %194 = vmatpush.msra.mxu0 0.0
    %195 = vmatpush.msra.mxu0 0.0
    %196 = vmatpush.msra.mxu0 0.0
    %197 = vmatpush.msra.mxu0 0.0
    %198 = vmatpush.msra.mxu0 0.0
    %199 = vmatpush.msra.mxu0 0.0
    %200 = vmatpush.msra.mxu0 0.0
    %201 = vmatpush.msra.mxu0 0.0
    %202 = vmatpush.msra.mxu0 0.0
    %203 = vmatpush.msra.mxu0 0.0
    %204 = vmatpush.msra.mxu0 0.0
    %205 = vmatpush.msra.mxu0 0.0
    %206 = vmatpush.msra.mxu0 0.0
    %v207 = vand.u32 %v140, 4294901760
    %v208 = vsub.f32 %v140, %v207
    %v209 = vand.u32 %v208, 4294901760
    %v210 = vsub.f32 %v208, %v209
    %v211 = vand.u32 %v210, 4294901760
    %212 = vmatpush.msra.mxu0 %v211
    %v213 = vand.u32 %v127, 4294901760
    %214 = vmatmul.f32.gmra.mxu0 %v213
    %v215 = vpop.f32.mrf.mxu0
    %v216 = vadd.f32 %v166, %v215
    %v217 = vand.u32 %v130, 4294901760
    %218 = vmatmul.f32.gmra.mxu0 %v217
    %v219 = vpop.f32.mrf.mxu0
    %v220 = vadd.f32 %v174, %v219
    %v221 = vand.u32 %v133, 4294901760
    %222 = vmatmul.f32.gmra.mxu0 %v221
    %v223 = vpop.f32.mrf.mxu0
    %v224 = vadd.f32 %v182, %v223
    %v225 = vand.u32 %v136, 4294901760
    %226 = vmatmul.f32.gmra.mxu0 %v225
    %v227 = vpop.f32.mrf.mxu0
    %v228 = vadd.f32 %v190, %v227
    %229 = vdwg.mxu0
    %230 = vmatpush.msra.mxu0 0.0
    %231 = vmatpush.msra.mxu0 0.0
    %232 = vmatpush.msra.mxu0 0.0
    %233 = vmatpush.msra.mxu0 0.0
    %234 = vmatpush.msra.mxu0 0.0
    %235 = vmatpush.msra.mxu0 0.0
    %236 = vmatpush.msra.mxu0 0.0
    %237 = vmatpush.msra.mxu0 0.0
    %238 = vmatpush.msra.mxu0 0.0
    %239 = vmatpush.msra.mxu0 0.0
    %240 = vmatpush.msra.mxu0 0.0
    %241 = vmatpush.msra.mxu0 0.0
    %242 = vmatpush.msra.mxu0 0.0
    %243 = vmatpush.msra.mxu0 0.0
    %244 = vmatpush.msra.mxu0 0.0
    %v245 = vand.u32 %v140, 4294901760
    %v246 = vsub.f32 %v140, %v245
    %247 = vmatpush.msra.mxu0 %v246
    %v248 = vand.u32 %v127, 4294901760
    %v249 = vsub.f32 %v127, %v248
    %250 = vmatmul.f32.gmra.mxu0 %v249
    %v251 = vpop.f32.mrf.mxu0
    %v252 = vadd.f32 %v216, %v251
    %v253 = vand.u32 %v130, 4294901760
    %v254 = vsub.f32 %v130, %v253
    %255 = vmatmul.f32.gmra.mxu0 %v254
    %v256 = vpop.f32.mrf.mxu0
    %v257 = vadd.f32 %v220, %v256
    %v258 = vand.u32 %v133, 4294901760
    %v259 = vsub.f32 %v133, %v258
    %260 = vmatmul.f32.gmra.mxu0 %v259
    %v261 = vpop.f32.mrf.mxu0
    %v262 = vadd.f32 %v224, %v261
    %v263 = vand.u32 %v136, 4294901760
    %v264 = vsub.f32 %v136, %v263
    %265 = vmatmul.f32.gmra.mxu0 %v264
    %v266 = vpop.f32.mrf.mxu0
    %v267 = vadd.f32 %v228, %v266
    %268 = vdwg.mxu0
    %269 = vmatpush.msra.mxu0 0.0
    %270 = vmatpush.msra.mxu0 0.0
    %271 = vmatpush.msra.mxu0 0.0
    %272 = vmatpush.msra.mxu0 0.0
    %273 = vmatpush.msra.mxu0 0.0
    %274 = vmatpush.msra.mxu0 0.0
    %275 = vmatpush.msra.mxu0 0.0
    %276 = vmatpush.msra.mxu0 0.0
    %277 = vmatpush.msra.mxu0 0.0
    %278 = vmatpush.msra.mxu0 0.0
    %279 = vmatpush.msra.mxu0 0.0
    %280 = vmatpush.msra.mxu0 0.0
    %281 = vmatpush.msra.mxu0 0.0
    %282 = vmatpush.msra.mxu0 0.0
    %283 = vmatpush.msra.mxu0 0.0
    %v284 = vand.u32 %v140, 4294901760
    %285 = vmatpush.msra.mxu0 %v284
    %v286 = vand.u32 %v127, 4294901760
    %v287 = vsub.f32 %v127, %v286
    %v288 = vand.u32 %v287, 4294901760
    %289 = vmatmul.f32.gmra.mxu0 %v288
    %v290 = vpop.f32.mrf.mxu0
    %v291 = vadd.f32 %v252, %v290
    %v292 = vand.u32 %v130, 4294901760
    %v293 = vsub.f32 %v130, %v292
    %v294 = vand.u32 %v293, 4294901760
    %295 = vmatmul.f32.gmra.mxu0 %v294
    %v296 = vpop.f32.mrf.mxu0
    %v297 = vadd.f32 %v257, %v296
    %v298 = vand.u32 %v133, 4294901760
    %v299 = vsub.f32 %v133, %v298
    %v300 = vand.u32 %v299, 4294901760
    %301 = vmatmul.f32.gmra.mxu0 %v300
    %v302 = vpop.f32.mrf.mxu0
    %v303 = vadd.f32 %v262, %v302
    %v304 = vand.u32 %v136, 4294901760
    %v305 = vsub.f32 %v136, %v304
    %v306 = vand.u32 %v305, 4294901760
    %307 = vmatmul.f32.gmra.mxu0 %v306
    %v308 = vpop.f32.mrf.mxu0
    %v309 = vadd.f32 %v267, %v308
    %310 = vdwg.mxu0
    %311 = vmatpush.msra.mxu0 0.0
    %312 = vmatpush.msra.mxu0 0.0
    %313 = vmatpush.msra.mxu0 0.0
    %314 = vmatpush.msra.mxu0 0.0
    %315 = vmatpush.msra.mxu0 0.0
    %316 = vmatpush.msra.mxu0 0.0
    %317 = vmatpush.msra.mxu0 0.0
    %318 = vmatpush.msra.mxu0 0.0
    %319 = vmatpush.msra.mxu0 0.0
    %320 = vmatpush.msra.mxu0 0.0
    %321 = vmatpush.msra.mxu0 0.0
    %322 = vmatpush.msra.mxu0 0.0
    %323 = vmatpush.msra.mxu0 0.0
    %324 = vmatpush.msra.mxu0 0.0
    %325 = vmatpush.msra.mxu0 0.0
    %v326 = vand.u32 %v140, 4294901760
    %v327 = vsub.f32 %v140, %v326
    %v328 = vand.u32 %v327, 4294901760
    %329 = vmatpush.msra.mxu0 %v328
    %v330 = vand.u32 %v127, 4294901760
    %331 = vmatmul.f32.gmra.mxu0 %v330
    %v332 = vpop.f32.mrf.mxu0
    %v333 = vadd.f32 %v291, %v332
    %v334 = vand.u32 %v130, 4294901760
    %335 = vmatmul.f32.gmra.mxu0 %v334
    %v336 = vpop.f32.mrf.mxu0
    %v337 = vadd.f32 %v297, %v336
    %v338 = vand.u32 %v133, 4294901760
    %339 = vmatmul.f32.gmra.mxu0 %v338
    %v340 = vpop.f32.mrf.mxu0
    %v341 = vadd.f32 %v303, %v340
    %v342 = vand.u32 %v136, 4294901760
    %343 = vmatmul.f32.gmra.mxu0 %v342
    %v344 = vpop.f32.mrf.mxu0
    %v345 = vadd.f32 %v309, %v344
    %346 = vdwg.mxu0
    %347 = vmatpush.msra.mxu0 0.0
    %348 = vmatpush.msra.mxu0 0.0
    %349 = vmatpush.msra.mxu0 0.0
    %350 = vmatpush.msra.mxu0 0.0
    %351 = vmatpush.msra.mxu0 0.0
    %352 = vmatpush.msra.mxu0 0.0
    %353 = vmatpush.msra.mxu0 0.0
    %354 = vmatpush.msra.mxu0 0.0
    %355 = vmatpush.msra.mxu0 0.0
    %356 = vmatpush.msra.mxu0 0.0
    %357 = vmatpush.msra.mxu0 0.0
    %358 = vmatpush.msra.mxu0 0.0
    %359 = vmatpush.msra.mxu0 0.0
    %360 = vmatpush.msra.mxu0 0.0
    %361 = vmatpush.msra.mxu0 0.0
    %v362 = vand.u32 %v140, 4294901760
    %363 = vmatpush.msra.mxu0 %v362
    %v364 = vand.u32 %v127, 4294901760
    %365 = vmatmul.f32.gmra.mxu0 %v364
    %v366 = vpop.f32.mrf.mxu0
    %v367 = vadd.f32 %v333, %v366
    %v368 = vand.u32 %v130, 4294901760
    %369 = vmatmul.f32.gmra.mxu0 %v368
    %v370 = vpop.f32.mrf.mxu0
    %v371 = vadd.f32 %v337, %v370
    %v372 = vand.u32 %v133, 4294901760
    %373 = vmatmul.f32.gmra.mxu0 %v372
    %v374 = vpop.f32.mrf.mxu0
    %v375 = vadd.f32 %v341, %v374
    %v376 = vand.u32 %v136, 4294901760
    %377 = vmatmul.f32.gmra.mxu0 %v376
    %v378 = vpop.f32.mrf.mxu0
    %v379 = vadd.f32 %v345, %v378
    %380 = vdwg.mxu0
    %vm381 = vcmask 392192
    %v383 = vsel %vm381, %v117, 0
    %v386 = vsel %vm381, %v118, 0
    %v389 = vsel %vm381, %v119, 0
    %v392 = vsel %vm381, %v120, 0
    %394 = vmatpush.msra.mxu0 0.0
    %395 = vmatpush.msra.mxu0 0.0
    %396 = vmatpush.msra.mxu0 0.0
    %397 = vmatpush.msra.mxu0 0.0
    %398 = vmatpush.msra.mxu0 0.0
    %399 = vmatpush.msra.mxu0 0.0
    %400 = vmatpush.msra.mxu0 0.0
    %401 = vmatpush.msra.mxu0 0.0
    %402 = vmatpush.msra.mxu0 0.0
    %403 = vmatpush.msra.mxu0 0.0
    %v404 = vand.u32 %v115, 4294901760
    %405 = vmatpush.msra.mxu0 %v404
    %v406 = vand.u32 %v114, 4294901760
    %407 = vmatpush.msra.mxu0 %v406
    %v408 = vand.u32 %v113, 4294901760
    %409 = vmatpush.msra.mxu0 %v408
    %v410 = vand.u32 %v112, 4294901760
    %411 = vmatpush.msra.mxu0 %v410
    %v412 = vand.u32 %v111, 4294901760
    %413 = vmatpush.msra.mxu0 %v412
    %v414 = vand.u32 %v110, 4294901760
    %415 = vmatpush.msra.mxu0 %v414
    %v416 = vand.u32 %v383, 4294901760
    %v417 = vsub.f32 %v383, %v416
    %v418 = vand.u32 %v417, 4294901760
    %v419 = vsub.f32 %v417, %v418
    %v420 = vand.u32 %v419, 4294901760
    %421 = vmatmul.f32.gmra.mxu0 %v420
    %v422 = vpop.f32.mrf.mxu0
    %v423 = vadd.f32 %v367, %v422
    %v424 = vand.u32 %v386, 4294901760
    %v425 = vsub.f32 %v386, %v424
    %v426 = vand.u32 %v425, 4294901760
    %v427 = vsub.f32 %v425, %v426
    %v428 = vand.u32 %v427, 4294901760
    %429 = vmatmul.f32.gmra.mxu0 %v428
    %v430 = vpop.f32.mrf.mxu0
    %v431 = vadd.f32 %v371, %v430
    %v432 = vand.u32 %v389, 4294901760
    %v433 = vsub.f32 %v389, %v432
    %v434 = vand.u32 %v433, 4294901760
    %v435 = vsub.f32 %v433, %v434
    %v436 = vand.u32 %v435, 4294901760
    %437 = vmatmul.f32.gmra.mxu0 %v436
    %v438 = vpop.f32.mrf.mxu0
    %v439 = vadd.f32 %v375, %v438
    %v440 = vand.u32 %v392, 4294901760
    %v441 = vsub.f32 %v392, %v440
    %v442 = vand.u32 %v441, 4294901760
    %v443 = vsub.f32 %v441, %v442
    %v444 = vand.u32 %v443, 4294901760
    %445 = vmatmul.f32.gmra.mxu0 %v444
    %v446 = vpop.f32.mrf.mxu0
    %v447 = vadd.f32 %v379, %v446
    %448 = vdwg.mxu0
    %449 = vmatpush.msra.mxu0 0.0
    %450 = vmatpush.msra.mxu0 0.0
    %451 = vmatpush.msra.mxu0 0.0
    %452 = vmatpush.msra.mxu0 0.0
    %453 = vmatpush.msra.mxu0 0.0
    %454 = vmatpush.msra.mxu0 0.0
    %455 = vmatpush.msra.mxu0 0.0
    %456 = vmatpush.msra.mxu0 0.0
    %457 = vmatpush.msra.mxu0 0.0
    %458 = vmatpush.msra.mxu0 0.0
    %v459 = vand.u32 %v115, 4294901760
    %v460 = vsub.f32 %v115, %v459
    %v461 = vand.u32 %v460, 4294901760
    %v462 = vsub.f32 %v460, %v461
    %v463 = vand.u32 %v462, 4294901760
    %464 = vmatpush.msra.mxu0 %v463
    %v465 = vand.u32 %v114, 4294901760
    %v466 = vsub.f32 %v114, %v465
    %v467 = vand.u32 %v466, 4294901760
    %v468 = vsub.f32 %v466, %v467
    %v469 = vand.u32 %v468, 4294901760
    %470 = vmatpush.msra.mxu0 %v469
    %v471 = vand.u32 %v113, 4294901760
    %v472 = vsub.f32 %v113, %v471
    %v473 = vand.u32 %v472, 4294901760
    %v474 = vsub.f32 %v472, %v473
    %v475 = vand.u32 %v474, 4294901760
    %476 = vmatpush.msra.mxu0 %v475
    %v477 = vand.u32 %v112, 4294901760
    %v478 = vsub.f32 %v112, %v477
    %v479 = vand.u32 %v478, 4294901760
    %v480 = vsub.f32 %v478, %v479
    %v481 = vand.u32 %v480, 4294901760
    %482 = vmatpush.msra.mxu0 %v481
    %v483 = vand.u32 %v111, 4294901760
    %v484 = vsub.f32 %v111, %v483
    %v485 = vand.u32 %v484, 4294901760
    %v486 = vsub.f32 %v484, %v485
    %v487 = vand.u32 %v486, 4294901760
    %488 = vmatpush.msra.mxu0 %v487
    %v489 = vand.u32 %v110, 4294901760
    %v490 = vsub.f32 %v110, %v489
    %v491 = vand.u32 %v490, 4294901760
    %v492 = vsub.f32 %v490, %v491
    %v493 = vand.u32 %v492, 4294901760
    %494 = vmatpush.msra.mxu0 %v493
    %v495 = vand.u32 %v383, 4294901760
    %496 = vmatmul.f32.gmra.mxu0 %v495
    %v497 = vpop.f32.mrf.mxu0
    %v498 = vadd.f32 %v423, %v497
    %v499 = vand.u32 %v386, 4294901760
    %500 = vmatmul.f32.gmra.mxu0 %v499
    %v501 = vpop.f32.mrf.mxu0
    %v502 = vadd.f32 %v431, %v501
    %v503 = vand.u32 %v389, 4294901760
    %504 = vmatmul.f32.gmra.mxu0 %v503
    %v505 = vpop.f32.mrf.mxu0
    %v506 = vadd.f32 %v439, %v505
    %v507 = vand.u32 %v392, 4294901760
    %508 = vmatmul.f32.gmra.mxu0 %v507
    %v509 = vpop.f32.mrf.mxu0
    %v510 = vadd.f32 %v447, %v509
    %511 = vdwg.mxu0
    %512 = vmatpush.msra.mxu0 0.0
    %513 = vmatpush.msra.mxu0 0.0
    %514 = vmatpush.msra.mxu0 0.0
    %515 = vmatpush.msra.mxu0 0.0
    %516 = vmatpush.msra.mxu0 0.0
    %517 = vmatpush.msra.mxu0 0.0
    %518 = vmatpush.msra.mxu0 0.0
    %519 = vmatpush.msra.mxu0 0.0
    %520 = vmatpush.msra.mxu0 0.0
    %521 = vmatpush.msra.mxu0 0.0
    %v522 = vand.u32 %v115, 4294901760
    %v523 = vsub.f32 %v115, %v522
    %524 = vmatpush.msra.mxu0 %v523
    %v525 = vand.u32 %v114, 4294901760
    %v526 = vsub.f32 %v114, %v525
    %527 = vmatpush.msra.mxu0 %v526
    %v528 = vand.u32 %v113, 4294901760
    %v529 = vsub.f32 %v113, %v528
    %530 = vmatpush.msra.mxu0 %v529
    %v531 = vand.u32 %v112, 4294901760
    %v532 = vsub.f32 %v112, %v531
    %533 = vmatpush.msra.mxu0 %v532
    %v534 = vand.u32 %v111, 4294901760
    %v535 = vsub.f32 %v111, %v534
    %536 = vmatpush.msra.mxu0 %v535
    %v537 = vand.u32 %v110, 4294901760
    %v538 = vsub.f32 %v110, %v537
    %539 = vmatpush.msra.mxu0 %v538
    %v540 = vand.u32 %v383, 4294901760
    %v541 = vsub.f32 %v383, %v540
    %542 = vmatmul.f32.gmra.mxu0 %v541
    %v543 = vpop.f32.mrf.mxu0
    %v544 = vadd.f32 %v498, %v543
    %v545 = vand.u32 %v386, 4294901760
    %v546 = vsub.f32 %v386, %v545
    %547 = vmatmul.f32.gmra.mxu0 %v546
    %v548 = vpop.f32.mrf.mxu0
    %v549 = vadd.f32 %v502, %v548
    %v550 = vand.u32 %v389, 4294901760
    %v551 = vsub.f32 %v389, %v550
    %552 = vmatmul.f32.gmra.mxu0 %v551
    %v553 = vpop.f32.mrf.mxu0
    %v554 = vadd.f32 %v506, %v553
    %v555 = vand.u32 %v392, 4294901760
    %v556 = vsub.f32 %v392, %v555
    %557 = vmatmul.f32.gmra.mxu0 %v556
    %v558 = vpop.f32.mrf.mxu0
    %v559 = vadd.f32 %v510, %v558
    %560 = vdwg.mxu0
    %561 = vmatpush.msra.mxu0 0.0
    %562 = vmatpush.msra.mxu0 0.0
    %563 = vmatpush.msra.mxu0 0.0
    %564 = vmatpush.msra.mxu0 0.0
    %565 = vmatpush.msra.mxu0 0.0
    %566 = vmatpush.msra.mxu0 0.0
    %567 = vmatpush.msra.mxu0 0.0
    %568 = vmatpush.msra.mxu0 0.0
    %569 = vmatpush.msra.mxu0 0.0
    %570 = vmatpush.msra.mxu0 0.0
    %v571 = vand.u32 %v115, 4294901760
    %572 = vmatpush.msra.mxu0 %v571
    %v573 = vand.u32 %v114, 4294901760
    %574 = vmatpush.msra.mxu0 %v573
    %v575 = vand.u32 %v113, 4294901760
    %576 = vmatpush.msra.mxu0 %v575
    %v577 = vand.u32 %v112, 4294901760
    %578 = vmatpush.msra.mxu0 %v577
    %v579 = vand.u32 %v111, 4294901760
    %580 = vmatpush.msra.mxu0 %v579
    %v581 = vand.u32 %v110, 4294901760
    %582 = vmatpush.msra.mxu0 %v581
    %v583 = vand.u32 %v383, 4294901760
    %v584 = vsub.f32 %v383, %v583
    %v585 = vand.u32 %v584, 4294901760
    %586 = vmatmul.f32.gmra.mxu0 %v585
    %v587 = vpop.f32.mrf.mxu0
    %v588 = vadd.f32 %v544, %v587
    %v589 = vand.u32 %v386, 4294901760
    %v590 = vsub.f32 %v386, %v589
    %v591 = vand.u32 %v590, 4294901760
    %592 = vmatmul.f32.gmra.mxu0 %v591
    %v593 = vpop.f32.mrf.mxu0
    %v594 = vadd.f32 %v549, %v593
    %v595 = vand.u32 %v389, 4294901760
    %v596 = vsub.f32 %v389, %v595
    %v597 = vand.u32 %v596, 4294901760
    %598 = vmatmul.f32.gmra.mxu0 %v597
    %v599 = vpop.f32.mrf.mxu0
    %v600 = vadd.f32 %v554, %v599
    %v601 = vand.u32 %v392, 4294901760
    %v602 = vsub.f32 %v392, %v601
    %v603 = vand.u32 %v602, 4294901760
    %604 = vmatmul.f32.gmra.mxu0 %v603
    %v605 = vpop.f32.mrf.mxu0
    %v606 = vadd.f32 %v559, %v605
    %607 = vdwg.mxu0
    %608 = vmatpush.msra.mxu0 0.0
    %609 = vmatpush.msra.mxu0 0.0
    %610 = vmatpush.msra.mxu0 0.0
    %611 = vmatpush.msra.mxu0 0.0
    %612 = vmatpush.msra.mxu0 0.0
    %613 = vmatpush.msra.mxu0 0.0
    %614 = vmatpush.msra.mxu0 0.0
    %615 = vmatpush.msra.mxu0 0.0
    %616 = vmatpush.msra.mxu0 0.0
    %617 = vmatpush.msra.mxu0 0.0
    %v618 = vand.u32 %v115, 4294901760
    %v619 = vsub.f32 %v115, %v618
    %v620 = vand.u32 %v619, 4294901760
    %621 = vmatpush.msra.mxu0 %v620
    %v622 = vand.u32 %v114, 4294901760
    %v623 = vsub.f32 %v114, %v622
    %v624 = vand.u32 %v623, 4294901760
    %625 = vmatpush.msra.mxu0 %v624
    %v626 = vand.u32 %v113, 4294901760
    %v627 = vsub.f32 %v113, %v626
    %v628 = vand.u32 %v627, 4294901760
    %629 = vmatpush.msra.mxu0 %v628
    %v630 = vand.u32 %v112, 4294901760
    %v631 = vsub.f32 %v112, %v630
    %v632 = vand.u32 %v631, 4294901760
    %633 = vmatpush.msra.mxu0 %v632
    %v634 = vand.u32 %v111, 4294901760
    %v635 = vsub.f32 %v111, %v634
    %v636 = vand.u32 %v635, 4294901760
    %637 = vmatpush.msra.mxu0 %v636
    %v638 = vand.u32 %v110, 4294901760
    %v639 = vsub.f32 %v110, %v638
    %v640 = vand.u32 %v639, 4294901760
    %641 = vmatpush.msra.mxu0 %v640
    %v642 = vand.u32 %v383, 4294901760
    %643 = vmatmul.f32.gmra.mxu0 %v642
    %v644 = vpop.f32.mrf.mxu0
    %v645 = vadd.f32 %v588, %v644
    %v646 = vand.u32 %v386, 4294901760
    %647 = vmatmul.f32.gmra.mxu0 %v646
    %v648 = vpop.f32.mrf.mxu0
    %v649 = vadd.f32 %v594, %v648
    %v650 = vand.u32 %v389, 4294901760
    %651 = vmatmul.f32.gmra.mxu0 %v650
    %v652 = vpop.f32.mrf.mxu0
    %v653 = vadd.f32 %v600, %v652
    %v654 = vand.u32 %v392, 4294901760
    %655 = vmatmul.f32.gmra.mxu0 %v654
    %v656 = vpop.f32.mrf.mxu0
    %v657 = vadd.f32 %v606, %v656
    %658 = vdwg.mxu0
    %659 = vmatpush.msra.mxu0 0.0
    %660 = vmatpush.msra.mxu0 0.0
    %661 = vmatpush.msra.mxu0 0.0
    %662 = vmatpush.msra.mxu0 0.0
    %663 = vmatpush.msra.mxu0 0.0
    %664 = vmatpush.msra.mxu0 0.0
    %665 = vmatpush.msra.mxu0 0.0
    %666 = vmatpush.msra.mxu0 0.0
    %667 = vmatpush.msra.mxu0 0.0
    %668 = vmatpush.msra.mxu0 0.0
    %v669 = vand.u32 %v115, 4294901760
    %670 = vmatpush.msra.mxu0 %v669
    %v671 = vand.u32 %v114, 4294901760
    %672 = vmatpush.msra.mxu0 %v671
    %v673 = vand.u32 %v113, 4294901760
    %674 = vmatpush.msra.mxu0 %v673
    %v675 = vand.u32 %v112, 4294901760
    %676 = vmatpush.msra.mxu0 %v675
    %v677 = vand.u32 %v111, 4294901760
    %678 = vmatpush.msra.mxu0 %v677
    %v679 = vand.u32 %v110, 4294901760
    %680 = vmatpush.msra.mxu0 %v679
    %v681 = vand.u32 %v383, 4294901760
    %682 = vmatmul.f32.gmra.mxu0 %v681
    %v683 = vpop.f32.mrf.mxu0
    %v684 = vadd.f32 %v645, %v683
    %v685 = vand.u32 %v386, 4294901760
    %686 = vmatmul.f32.gmra.mxu0 %v685
    %v687 = vpop.f32.mrf.mxu0
    %v688 = vadd.f32 %v649, %v687
    %v689 = vand.u32 %v389, 4294901760
    %690 = vmatmul.f32.gmra.mxu0 %v689
    %v691 = vpop.f32.mrf.mxu0
    %v692 = vadd.f32 %v653, %v691
    %v693 = vand.u32 %v392, 4294901760
    %694 = vmatmul.f32.gmra.mxu0 %v693
    %v695 = vpop.f32.mrf.mxu0
    %v696 = vadd.f32 %v657, %v695
    %697 = vdwg.mxu0
    %v698 = vld [vmem:[%s4] sm:$0xff]
    %v699 = vld [vmem:[%s4 + $0x8] sm:$0xff]
    %v700 = vld [vmem:[%s4 + $0x10] sm:$0xff]
    %v701 = vld [vmem:[%s4 + $0x18] sm:$0xff]
    %703 = vset.pattern.permute.xlu0 0
    %704 = vperm.xlu0 %703, %v698
    %v705 = vpop.permute.xlu0 %704
    %708 = vset.pattern.permute.xlu0 0
    %709 = vperm.xlu0 %708, %v699
    %v710 = vpop.permute.xlu0 %709
    %713 = vset.pattern.permute.xlu0 0
    %714 = vperm.xlu0 %713, %v700
    %v715 = vpop.permute.xlu0 %714
    %718 = vset.pattern.permute.xlu0 0
    %719 = vperm.xlu0 %718, %v701
    %v720 = vpop.permute.xlu0 %719
    %v722 = vadd.f32 %v684, %v705
    %v723 = vadd.f32 %v688, %v710
    %v724 = vadd.f32 %v692, %v715
    %v725 = vadd.f32 %v696, %v720
    %v726 = vmax.f32 %v722, 0.0
    %v727 = vmax.f32 %v723, 0.0
    %v728 = vmax.f32 %v724, 0.0
    %v729 = vmax.f32 %v725, 0.0
    %v730 = vld [vmem:[%s5] sm:$0xff]
    %v731 = vld [vmem:[%s5 + $0x8] sm:$0xff]
    %v732 = vld [vmem:[%s6] sm:$0xff]
    %v733 = vld [vmem:[%s6 + $0x8] sm:$0xff]
    %735 = vset.pattern.permute.xlu0 0
    %736 = vperm.xlu0 %735, %v732
    %v737 = vpop.permute.xlu0 %736
    %740 = vset.pattern.permute.xlu0 0
    %741 = vperm.xlu0 %740, %v733
    %v742 = vpop.permute.xlu0 %741
    %vm744 = vcmask 261120
    %v746 = vsel %vm744, %v730, 0
    %v749 = vsel %vm744, %v731, 0
    %751 = vmatpush.msra.mxu0 0.0
    %752 = vmatpush.msra.mxu0 0.0
    %753 = vmatpush.msra.mxu0 0.0
    %754 = vmatpush.msra.mxu0 0.0
    %755 = vmatpush.msra.mxu0 0.0
    %756 = vmatpush.msra.mxu0 0.0
    %757 = vmatpush.msra.mxu0 0.0
    %758 = vmatpush.msra.mxu0 0.0
    %759 = vmatpush.msra.mxu0 0.0
    %760 = vmatpush.msra.mxu0 0.0
    %761 = vmatpush.msra.mxu0 0.0
    %762 = vmatpush.msra.mxu0 0.0
    %v763 = vand.u32 %v729, 4294901760
    %764 = vmatpush.msra.mxu0 %v763
    %v765 = vand.u32 %v728, 4294901760
    %766 = vmatpush.msra.mxu0 %v765
    %v767 = vand.u32 %v727, 4294901760
    %768 = vmatpush.msra.mxu0 %v767
    %v769 = vand.u32 %v726, 4294901760
    %770 = vmatpush.msra.mxu0 %v769
    %v771 = vand.u32 %v746, 4294901760
    %v772 = vsub.f32 %v746, %v771
    %v773 = vand.u32 %v772, 4294901760
    %v774 = vsub.f32 %v772, %v773
    %v775 = vand.u32 %v774, 4294901760
    %776 = vmatmul.f32.gmra.mxu0 %v775
    %v777 = vpop.f32.mrf.mxu0
    %v778 = vadd.f32 %v737, %v777
    %v779 = vand.u32 %v749, 4294901760
    %v780 = vsub.f32 %v749, %v779
    %v781 = vand.u32 %v780, 4294901760
    %v782 = vsub.f32 %v780, %v781
    %v783 = vand.u32 %v782, 4294901760
    %784 = vmatmul.f32.gmra.mxu0 %v783
    %v785 = vpop.f32.mrf.mxu0
    %v786 = vadd.f32 %v742, %v785
    %787 = vdwg.mxu0
    %788 = vmatpush.msra.mxu0 0.0
    %789 = vmatpush.msra.mxu0 0.0
    %790 = vmatpush.msra.mxu0 0.0
    %791 = vmatpush.msra.mxu0 0.0
    %792 = vmatpush.msra.mxu0 0.0
    %793 = vmatpush.msra.mxu0 0.0
    %794 = vmatpush.msra.mxu0 0.0
    %795 = vmatpush.msra.mxu0 0.0
    %796 = vmatpush.msra.mxu0 0.0
    %797 = vmatpush.msra.mxu0 0.0
    %798 = vmatpush.msra.mxu0 0.0
    %799 = vmatpush.msra.mxu0 0.0
    %v800 = vand.u32 %v729, 4294901760
    %v801 = vsub.f32 %v729, %v800
    %v802 = vand.u32 %v801, 4294901760
    %v803 = vsub.f32 %v801, %v802
    %v804 = vand.u32 %v803, 4294901760
    %805 = vmatpush.msra.mxu0 %v804
    %v806 = vand.u32 %v728, 4294901760
    %v807 = vsub.f32 %v728, %v806
    %v808 = vand.u32 %v807, 4294901760
    %v809 = vsub.f32 %v807, %v808
    %v810 = vand.u32 %v809, 4294901760
    %811 = vmatpush.msra.mxu0 %v810
    %v812 = vand.u32 %v727, 4294901760
    %v813 = vsub.f32 %v727, %v812
    %v814 = vand.u32 %v813, 4294901760
    %v815 = vsub.f32 %v813, %v814
    %v816 = vand.u32 %v815, 4294901760
    %817 = vmatpush.msra.mxu0 %v816
    %v818 = vand.u32 %v726, 4294901760
    %v819 = vsub.f32 %v726, %v818
    %v820 = vand.u32 %v819, 4294901760
    %v821 = vsub.f32 %v819, %v820
    %v822 = vand.u32 %v821, 4294901760
    %823 = vmatpush.msra.mxu0 %v822
    %v824 = vand.u32 %v746, 4294901760
    %825 = vmatmul.f32.gmra.mxu0 %v824
    %v826 = vpop.f32.mrf.mxu0
    %v827 = vadd.f32 %v778, %v826
    %v828 = vand.u32 %v749, 4294901760
    %829 = vmatmul.f32.gmra.mxu0 %v828
    %v830 = vpop.f32.mrf.mxu0
    %v831 = vadd.f32 %v786, %v830
    %832 = vdwg.mxu0
    %833 = vmatpush.msra.mxu0 0.0
    %834 = vmatpush.msra.mxu0 0.0
    %835 = vmatpush.msra.mxu0 0.0
    %836 = vmatpush.msra.mxu0 0.0
    %837 = vmatpush.msra.mxu0 0.0
    %838 = vmatpush.msra.mxu0 0.0
    %839 = vmatpush.msra.mxu0 0.0
    %840 = vmatpush.msra.mxu0 0.0
    %841 = vmatpush.msra.mxu0 0.0
    %842 = vmatpush.msra.mxu0 0.0
    %843 = vmatpush.msra.mxu0 0.0
    %844 = vmatpush.msra.mxu0 0.0
    %v845 = vand.u32 %v729, 4294901760
    %v846 = vsub.f32 %v729, %v845
    %847 = vmatpush.msra.mxu0 %v846
    %v848 = vand.u32 %v728, 4294901760
    %v849 = vsub.f32 %v728, %v848
    %850 = vmatpush.msra.mxu0 %v849
    %v851 = vand.u32 %v727, 4294901760
    %v852 = vsub.f32 %v727, %v851
    %853 = vmatpush.msra.mxu0 %v852
    %v854 = vand.u32 %v726, 4294901760
    %v855 = vsub.f32 %v726, %v854
    %856 = vmatpush.msra.mxu0 %v855
    %v857 = vand.u32 %v746, 4294901760
    %v858 = vsub.f32 %v746, %v857
    %859 = vmatmul.f32.gmra.mxu0 %v858
    %v860 = vpop.f32.mrf.mxu0
    %v861 = vadd.f32 %v827, %v860
    %v862 = vand.u32 %v749, 4294901760
    %v863 = vsub.f32 %v749, %v862
    %864 = vmatmul.f32.gmra.mxu0 %v863
    %v865 = vpop.f32.mrf.mxu0
    %v866 = vadd.f32 %v831, %v865
    %867 = vdwg.mxu0
    %868 = vmatpush.msra.mxu0 0.0
    %869 = vmatpush.msra.mxu0 0.0
    %870 = vmatpush.msra.mxu0 0.0
    %871 = vmatpush.msra.mxu0 0.0
    %872 = vmatpush.msra.mxu0 0.0
    %873 = vmatpush.msra.mxu0 0.0
    %874 = vmatpush.msra.mxu0 0.0
    %875 = vmatpush.msra.mxu0 0.0
    %876 = vmatpush.msra.mxu0 0.0
    %877 = vmatpush.msra.mxu0 0.0
    %878 = vmatpush.msra.mxu0 0.0
    %879 = vmatpush.msra.mxu0 0.0
    %v880 = vand.u32 %v729, 4294901760
    %881 = vmatpush.msra.mxu0 %v880
    %v882 = vand.u32 %v728, 4294901760
    %883 = vmatpush.msra.mxu0 %v882
    %v884 = vand.u32 %v727, 4294901760
    %885 = vmatpush.msra.mxu0 %v884
    %v886 = vand.u32 %v726, 4294901760
    %887 = vmatpush.msra.mxu0 %v886
    %v888 = vand.u32 %v746, 4294901760
    %v889 = vsub.f32 %v746, %v888
    %v890 = vand.u32 %v889, 4294901760
    %891 = vmatmul.f32.gmra.mxu0 %v890
    %v892 = vpop.f32.mrf.mxu0
    %v893 = vadd.f32 %v861, %v892
    %v894 = vand.u32 %v749, 4294901760
    %v895 = vsub.f32 %v749, %v894
    %v896 = vand.u32 %v895, 4294901760
    %897 = vmatmul.f32.gmra.mxu0 %v896
    %v898 = vpop.f32.mrf.mxu0
    %v899 = vadd.f32 %v866, %v898
    %900 = vdwg.mxu0
    %901 = vmatpush.msra.mxu0 0.0
    %902 = vmatpush.msra.mxu0 0.0
    %903 = vmatpush.msra.mxu0 0.0
    %904 = vmatpush.msra.mxu0 0.0
    %905 = vmatpush.msra.mxu0 0.0
    %906 = vmatpush.msra.mxu0 0.0
    %907 = vmatpush.msra.mxu0 0.0
    %908 = vmatpush.msra.mxu0 0.0
    %909 = vmatpush.msra.mxu0 0.0
    %910 = vmatpush.msra.mxu0 0.0
    %911 = vmatpush.msra.mxu0 0.0
    %912 = vmatpush.msra.mxu0 0.0
    %v913 = vand.u32 %v729, 4294901760
    %v914 = vsub.f32 %v729, %v913
    %v915 = vand.u32 %v914, 4294901760
    %916 = vmatpush.msra.mxu0 %v915
    %v917 = vand.u32 %v728, 4294901760
    %v918 = vsub.f32 %v728, %v917
    %v919 = vand.u32 %v918, 4294901760
    %920 = vmatpush.msra.mxu0 %v919
    %v921 = vand.u32 %v727, 4294901760
    %v922 = vsub.f32 %v727, %v921
    %v923 = vand.u32 %v922, 4294901760
    %924 = vmatpush.msra.mxu0 %v923
    %v925 = vand.u32 %v726, 4294901760
    %v926 = vsub.f32 %v726, %v925
    %v927 = vand.u32 %v926, 4294901760
    %928 = vmatpush.msra.mxu0 %v927
    %v929 = vand.u32 %v746, 4294901760
    %930 = vmatmul.f32.gmra.mxu0 %v929
    %v931 = vpop.f32.mrf.mxu0
    %v932 = vadd.f32 %v893, %v931
    %v933 = vand.u32 %v749, 4294901760
    %934 = vmatmul.f32.gmra.mxu0 %v933
    %v935 = vpop.f32.mrf.mxu0
    %v936 = vadd.f32 %v899, %v935
    %937 = vdwg.mxu0
    %938 = vmatpush.msra.mxu0 0.0
    %939 = vmatpush.msra.mxu0 0.0
    %940 = vmatpush.msra.mxu0 0.0
    %941 = vmatpush.msra.mxu0 0.0
    %942 = vmatpush.msra.mxu0 0.0
    %943 = vmatpush.msra.mxu0 0.0
    %944 = vmatpush.msra.mxu0 0.0
    %945 = vmatpush.msra.mxu0 0.0
    %946 = vmatpush.msra.mxu0 0.0
    %947 = vmatpush.msra.mxu0 0.0
    %948 = vmatpush.msra.mxu0 0.0
    %949 = vmatpush.msra.mxu0 0.0
    %v950 = vand.u32 %v729, 4294901760
    %951 = vmatpush.msra.mxu0 %v950
    %v952 = vand.u32 %v728, 4294901760
    %953 = vmatpush.msra.mxu0 %v952
    %v954 = vand.u32 %v727, 4294901760
    %955 = vmatpush.msra.mxu0 %v954
    %v956 = vand.u32 %v726, 4294901760
    %957 = vmatpush.msra.mxu0 %v956
    %v958 = vand.u32 %v746, 4294901760
    %959 = vmatmul.f32.gmra.mxu0 %v958
    %v960 = vpop.f32.mrf.mxu0
    %v961 = vadd.f32 %v932, %v960
    %v962 = vand.u32 %v749, 4294901760
    %963 = vmatmul.f32.gmra.mxu0 %v962
    %v964 = vpop.f32.mrf.mxu0
    %v965 = vadd.f32 %v936, %v964
    %966 = vdwg.mxu0
    %v967 = vmax.f32 %v961, 0.0
    %v968 = vmax.f32 %v965, 0.0
    %v969 = vld [vmem:[%s7] sm:$0xff]
    %v970 = vld [vmem:[%s8] sm:$0xff]
    %972 = vset.pattern.permute.xlu0 0
    %973 = vperm.xlu0 %972, %v970
    %v974 = vpop.permute.xlu0 %973
    %vm976 = vcmask 130048
    %v978 = vsel %vm976, %v969, 0
    %980 = vmatpush.msra.mxu0 0.0
    %981 = vmatpush.msra.mxu0 0.0
    %982 = vmatpush.msra.mxu0 0.0
    %983 = vmatpush.msra.mxu0 0.0
    %984 = vmatpush.msra.mxu0 0.0
    %985 = vmatpush.msra.mxu0 0.0
    %986 = vmatpush.msra.mxu0 0.0
    %987 = vmatpush.msra.mxu0 0.0
    %988 = vmatpush.msra.mxu0 0.0
    %989 = vmatpush.msra.mxu0 0.0
    %990 = vmatpush.msra.mxu0 0.0
    %991 = vmatpush.msra.mxu0 0.0
    %992 = vmatpush.msra.mxu0 0.0
    %993 = vmatpush.msra.mxu0 0.0
    %v994 = vand.u32 %v968, 4294901760
    %995 = vmatpush.msra.mxu0 %v994
    %v996 = vand.u32 %v967, 4294901760
    %997 = vmatpush.msra.mxu0 %v996
    %v998 = vand.u32 %v978, 4294901760
    %v999 = vsub.f32 %v978, %v998
    %v1000 = vand.u32 %v999, 4294901760
    %v1001 = vsub.f32 %v999, %v1000
    %v1002 = vand.u32 %v1001, 4294901760
    %1003 = vmatmul.f32.gmra.mxu0 %v1002
    %v1004 = vpop.f32.mrf.mxu0
    %v1005 = vadd.f32 %v974, %v1004
    %1006 = vdwg.mxu0
    %1007 = vmatpush.msra.mxu0 0.0
    %1008 = vmatpush.msra.mxu0 0.0
    %1009 = vmatpush.msra.mxu0 0.0
    %1010 = vmatpush.msra.mxu0 0.0
    %1011 = vmatpush.msra.mxu0 0.0
    %1012 = vmatpush.msra.mxu0 0.0
    %1013 = vmatpush.msra.mxu0 0.0
    %1014 = vmatpush.msra.mxu0 0.0
    %1015 = vmatpush.msra.mxu0 0.0
    %1016 = vmatpush.msra.mxu0 0.0
    %1017 = vmatpush.msra.mxu0 0.0
    %1018 = vmatpush.msra.mxu0 0.0
    %1019 = vmatpush.msra.mxu0 0.0
    %1020 = vmatpush.msra.mxu0 0.0
    %v1021 = vand.u32 %v968, 4294901760
    %v1022 = vsub.f32 %v968, %v1021
    %v1023 = vand.u32 %v1022, 4294901760
    %v1024 = vsub.f32 %v1022, %v1023
    %v1025 = vand.u32 %v1024, 4294901760
    %1026 = vmatpush.msra.mxu0 %v1025
    %v1027 = vand.u32 %v967, 4294901760
    %v1028 = vsub.f32 %v967, %v1027
    %v1029 = vand.u32 %v1028, 4294901760
    %v1030 = vsub.f32 %v1028, %v1029
    %v1031 = vand.u32 %v1030, 4294901760
    %1032 = vmatpush.msra.mxu0 %v1031
    %v1033 = vand.u32 %v978, 4294901760
    %1034 = vmatmul.f32.gmra.mxu0 %v1033
    %v1035 = vpop.f32.mrf.mxu0
    %v1036 = vadd.f32 %v1005, %v1035
    %1037 = vdwg.mxu0
    %1038 = vmatpush.msra.mxu0 0.0
    %1039 = vmatpush.msra.mxu0 0.0
    %1040 = vmatpush.msra.mxu0 0.0
    %1041 = vmatpush.msra.mxu0 0.0
    %1042 = vmatpush.msra.mxu0 0.0
    %1043 = vmatpush.msra.mxu0 0.0
    %1044 = vmatpush.msra.mxu0 0.0
    %1045 = vmatpush.msra.mxu0 0.0
    %1046 = vmatpush.msra.mxu0 0.0
    %1047 = vmatpush.msra.mxu0 0.0
    %1048 = vmatpush.msra.mxu0 0.0
    %1049 = vmatpush.msra.mxu0 0.0
    %1050 = vmatpush.msra.mxu0 0.0
    %1051 = vmatpush.msra.mxu0 0.0
    %v1052 = vand.u32 %v968, 4294901760
    %v1053 = vsub.f32 %v968, %v1052
    %1054 = vmatpush.msra.mxu0 %v1053
    %v1055 = vand.u32 %v967, 4294901760
    %v1056 = vsub.f32 %v967, %v1055
    %1057 = vmatpush.msra.mxu0 %v1056
    %v1058 = vand.u32 %v978, 4294901760
    %v1059 = vsub.f32 %v978, %v1058
    %1060 = vmatmul.f32.gmra.mxu0 %v1059
    %v1061 = vpop.f32.mrf.mxu0
    %v1062 = vadd.f32 %v1036, %v1061
    %1063 = vdwg.mxu0
    %1064 = vmatpush.msra.mxu0 0.0
    %1065 = vmatpush.msra.mxu0 0.0
    %1066 = vmatpush.msra.mxu0 0.0
    %1067 = vmatpush.msra.mxu0 0.0
    %1068 = vmatpush.msra.mxu0 0.0
    %1069 = vmatpush.msra.mxu0 0.0
    %1070 = vmatpush.msra.mxu0 0.0
    %1071 = vmatpush.msra.mxu0 0.0
    %1072 = vmatpush.msra.mxu0 0.0
    %1073 = vmatpush.msra.mxu0 0.0
    %1074 = vmatpush.msra.mxu0 0.0
    %1075 = vmatpush.msra.mxu0 0.0
    %1076 = vmatpush.msra.mxu0 0.0
    %1077 = vmatpush.msra.mxu0 0.0
    %v1078 = vand.u32 %v968, 4294901760
    %1079 = vmatpush.msra.mxu0 %v1078
    %v1080 = vand.u32 %v967, 4294901760
    %1081 = vmatpush.msra.mxu0 %v1080
    %v1082 = vand.u32 %v978, 4294901760
    %v1083 = vsub.f32 %v978, %v1082
    %v1084 = vand.u32 %v1083, 4294901760
    %1085 = vmatmul.f32.gmra.mxu0 %v1084
    %v1086 = vpop.f32.mrf.mxu0
    %v1087 = vadd.f32 %v1062, %v1086
    %1088 = vdwg.mxu0
    %1089 = vmatpush.msra.mxu0 0.0
    %1090 = vmatpush.msra.mxu0 0.0
    %1091 = vmatpush.msra.mxu0 0.0
    %1092 = vmatpush.msra.mxu0 0.0
    %1093 = vmatpush.msra.mxu0 0.0
    %1094 = vmatpush.msra.mxu0 0.0
    %1095 = vmatpush.msra.mxu0 0.0
    %1096 = vmatpush.msra.mxu0 0.0
    %1097 = vmatpush.msra.mxu0 0.0
    %1098 = vmatpush.msra.mxu0 0.0
    %1099 = vmatpush.msra.mxu0 0.0
    %1100 = vmatpush.msra.mxu0 0.0
    %1101 = vmatpush.msra.mxu0 0.0
    %1102 = vmatpush.msra.mxu0 0.0
    %v1103 = vand.u32 %v968, 4294901760
    %v1104 = vsub.f32 %v968, %v1103
    %v1105 = vand.u32 %v1104, 4294901760
    %1106 = vmatpush.msra.mxu0 %v1105
    %v1107 = vand.u32 %v967, 4294901760
    %v1108 = vsub.f32 %v967, %v1107
    %v1109 = vand.u32 %v1108, 4294901760
    %1110 = vmatpush.msra.mxu0 %v1109
    %v1111 = vand.u32 %v978, 4294901760
    %1112 = vmatmul.f32.gmra.mxu0 %v1111
    %v1113 = vpop.f32.mrf.mxu0
    %v1114 = vadd.f32 %v1087, %v1113
    %1115 = vdwg.mxu0
    %1116 = vmatpush.msra.mxu0 0.0
    %1117 = vmatpush.msra.mxu0 0.0
    %1118 = vmatpush.msra.mxu0 0.0
    %1119 = vmatpush.msra.mxu0 0.0
    %1120 = vmatpush.msra.mxu0 0.0
    %1121 = vmatpush.msra.mxu0 0.0
    %1122 = vmatpush.msra.mxu0 0.0
    %1123 = vmatpush.msra.mxu0 0.0
    %1124 = vmatpush.msra.mxu0 0.0
    %1125 = vmatpush.msra.mxu0 0.0
    %1126 = vmatpush.msra.mxu0 0.0
    %1127 = vmatpush.msra.mxu0 0.0
    %1128 = vmatpush.msra.mxu0 0.0
    %1129 = vmatpush.msra.mxu0 0.0
    %v1130 = vand.u32 %v968, 4294901760
    %1131 = vmatpush.msra.mxu0 %v1130
    %v1132 = vand.u32 %v967, 4294901760
    %1133 = vmatpush.msra.mxu0 %v1132
    %v1134 = vand.u32 %v978, 4294901760
    %1135 = vmatmul.f32.gmra.mxu0 %v1134
    %v1136 = vpop.f32.mrf.mxu0
    %v1137 = vadd.f32 %v1114, %v1136
    %1138 = vdwg.mxu0
    %vm1139 = vcmask 244736
    %1140 = vst.msk [vmem:[#allocation2] sm:$0xff] %vm1139, %v1137
    // Predicated region
    $region38: #{tpu_custom_call.1} parent=1 // pred_check
      _
    $region39: #{tpu_custom_call.1} parent=1 // pred_check_branch
      %1142 = sbr.rel (0) target = $region41
    $region40: #{tpu_custom_call.1} parent=1 // pred_region
      %1144 = vsyncadd [#allocation3], 0
      %s1146 = sshll.u32 [#allocation2], 4
      %s1147 = int_to_ptr.vmem [resolvable:$true] %s1146
      %s1148 = sshll.u32 %s9, 4
      %s1149 = int_to_ptr.hbm [resolvable:$true] %s1148
      %1151 = dma.vmem_to_hbm [thread:$0]  %s1147, 128, %s1149, [#allocation3]
    $region41: #{tpu_custom_call.1} parent=1 // pred_fallthru
      _
    // Predicated region
    $region42: #{tpu_custom_call.1} parent=1 // pred_check
      _
    $region43: #{tpu_custom_call.1} parent=1 // pred_check_branch
      %1153 = sbr.rel (0) target = $region45
    $region44: #{tpu_custom_call.1} parent=1 // pred_region
      %1155 = dma.done [#allocation3], 128
    $region45: #{tpu_custom_call.1} parent=1 // pred_fallthru
      _
    %1156 = vsyncpa [#allocation3], 1

</llo_original>
